<compile_context>
chip_gen: v5e
topology: v5e:2x2
jax: 0.10.0
libtpu: 0.0.40
codegen_flags: <defaults>
</compile_context>

<pallas_src>
import math

import jax
import jax.numpy as jnp
from jax.experimental import pallas as pl
from jax.experimental.pallas import tpu as pltpu


def _mlp_kernel(x_ref, w1_ref, b1_ref, w2_ref, b2_ref, w3_ref, b3_ref,
                w4_ref, b4_ref, o_ref):
    # x_ref: (5, T) f32, lane-dense on the token axis.
    x = x_ref[...]

    # fc1: f32, K=5 (cheap) + ReLU.  drop_layer: identity (eval mode).
    h = jnp.dot(w1_ref[...], x, preferred_element_type=jnp.float32) + b1_ref[...]
    h = jnp.maximum(h, 0.0)

    # fc2: bf16 operands on the MXU, f32 accumulate; bias/ReLU stay f32.
    h = jnp.dot(w2_ref[...], h.astype(jnp.bfloat16),
                preferred_element_type=jnp.float32) + b2_ref[...]
    h = jnp.maximum(h, 0.0)

    # fc3: bf16 operands on the MXU, f32 accumulate; bias/ReLU stay f32.
    h = jnp.dot(w3_ref[...], h.astype(jnp.bfloat16),
                preferred_element_type=jnp.float32) + b3_ref[...]
    h = jnp.maximum(h, 0.0)

    # fc4: f32 (tiny M=2).  TODO(synk): move to VPU if vmatmul slot still binds.
    out = jnp.dot(w4_ref[...], h, preferred_element_type=jnp.float32) + b4_ref[...]
    o_ref[...] = out.astype(o_ref.dtype)          # (2, T) lane-dense store


def rgb2norm_forward(x, params, *, token_tile=16384):
    """x: (..., 5) float32.  Returns (..., 2) float32."""
    in_features = 5
    out_features = 2
    lead_shape = x.shape[:-1]
    assert x.shape[-1] == in_features

    x_flat = x.reshape(-1, in_features).astype(jnp.float32)
    n_tokens = x_flat.shape[0]

    # Token/lane tile: multiple of 128, large enough to amortize per-step
    # overhead and keep the MXU busy, shrunk for tiny inputs.
    tile = min(token_tile, pl.cdiv(max(n_tokens, 1), 128) * 128)
    grid = (pl.cdiv(max(n_tokens, 1), tile),)     # last block may be partial

    # Tokens onto lanes (layout plumbing; see TODO above about removing it).
    x_t = x_flat.T                                # (5, N)

    w1, b1, w2, b2, w3, b3, w4, b4 = params       # W: (out, in), b: (out, 1)
    w2 = w2.astype(jnp.bfloat16)                  # MXU-native for the 64x64 layers
    w3 = w3.astype(jnp.bfloat16)

    # Small weights/biases: whole arrays resident in VMEM, fetched once.
    vmem_spec = pl.BlockSpec(memory_space=pltpu.MemorySpace.VMEM)

    out_t = pl.pallas_call(
        _mlp_kernel,
        out_shape=jax.ShapeDtypeStruct((out_features, n_tokens), jnp.float32),
        grid_spec=pltpu.PrefetchScalarGridSpec(
            num_scalar_prefetch=0,
            grid=grid,
            in_specs=[
                pl.BlockSpec((in_features, tile), lambda i: (0, i)),
                vmem_spec, vmem_spec,   # w1, b1
                vmem_spec, vmem_spec,   # w2, b2
                vmem_spec, vmem_spec,   # w3, b3
                vmem_spec, vmem_spec,   # w4, b4
            ],
            out_specs=pl.BlockSpec((out_features, tile), lambda i: (0, i)),
        ),
        compiler_params=pltpu.CompilerParams(
            dimension_semantics=("parallel",),
            vmem_limit_bytes=48 * 1024 * 1024,    # >v5e's 16 MiB default, <v7x's 64 MiB
        ),
    )(x_t, w1, b1, w2, b2, w3, b3, w4, b4)

    out = out_t.T                                 # (N, 2)
    return out.reshape(*lead_shape, out_features)


def init_params(key):
    """nn.Linear-style init: U(-1/sqrt(fan_in), 1/sqrt(fan_in)).
    Weights stored (out_features, in_features), biases (out_features, 1)."""
    dims = [(5, 64), (64, 64), (64, 64), (64, 2)]
    params = []
    for (fan_in, fan_out) in dims:
        key, kw, kb = jax.random.split(key, 3)
        bound = 1.0 / math.sqrt(fan_in)
        w = jax.random.uniform(kw, (fan_out, fan_in), jnp.float32, -bound, bound)
        b = jax.random.uniform(kb, (fan_out, 1), jnp.float32, -bound, bound)
        params += [w, b]
    return tuple(params)


def reference_forward_f32(x, params):
    """Pure-f32 JAX reference on (N, 5) rows (matches the PyTorch module in eval)."""
    w1, b1, w2, b2, w3, b3, w4, b4 = params
    h = jax.nn.relu(x @ w1.T + b1[:, 0])
    h = jax.nn.relu(h @ w2.T + b2[:, 0])
    h = jax.nn.relu(h @ w3.T + b3[:, 0])
    return h @ w4.T + b4[:, 0]


def reference_forward_matched(x, params):
    """Reference with the same bf16 matmul precision as the kernel (layers 2/3)."""
    w1, b1, w2, b2, w3, b3, w4, b4 = params
    h = jax.nn.relu(x @ w1.T + b1[:, 0])
    h = jnp.dot(h.astype(jnp.bfloat16), w2.astype(jnp.bfloat16).T,
                preferred_element_type=jnp.float32) + b2[:, 0]
    h = jax.nn.relu(h)
    h = jnp.dot(h.astype(jnp.bfloat16), w3.astype(jnp.bfloat16).T,
                preferred_element_type=jnp.float32) + b3[:, 0]
    h = jax.nn.relu(h)
    return h @ w4.T + b4[:, 0]


if __name__ == "__main__":
    key = jax.random.PRNGKey(0)
    pkey, xkey = jax.random.split(key)
    params = init_params(pkey)

    # Small input consistent with the module: (..., 5) feature vectors
    # (e.g. per-pixel [R, G, B, x, y] samples).
    x = jax.random.normal(xkey, (2, 8, 16, 5), jnp.float32)

    out = rgb2norm_forward(x, params)
    out = jax.block_until_ready(out)
    assert out.shape == (2, 8, 16, 2), out.shape

    ref_m = reference_forward_matched(x.reshape(-1, 5), params).reshape(2, 8, 16, 2)
    ref32 = reference_forward_f32(x.reshape(-1, 5), params).reshape(2, 8, 16, 2)

    err_matched = float(jnp.max(jnp.abs(out - ref_m)))
    err_f32 = float(jnp.max(jnp.abs(out - ref32)))
    # Tight vs. the precision-matched reference; loose vs. pure-f32 (expected
    # bf16 loss in layers 2/3, not a bug).
    assert err_matched < 1e-3, err_matched
    assert err_f32 < 3e-2, err_f32

    print("KERNEL_OK")
</pallas_src>

<mosaic_0001>
module attributes {stable_mosaic.version = 11 : i64} {
  func.func @_mlp_kernel(%arg0: i32, %arg1: memref<5x256xf32, #tpu.memory_space<vmem>>, %arg2: memref<64x5xf32, #tpu.memory_space<vmem>>, %arg3: memref<64x1xf32, #tpu.memory_space<vmem>>, %arg4: memref<64x64xbf16, #tpu.memory_space<vmem>>, %arg5: memref<64x1xf32, #tpu.memory_space<vmem>>, %arg6: memref<64x64xbf16, #tpu.memory_space<vmem>>, %arg7: memref<64x1xf32, #tpu.memory_space<vmem>>, %arg8: memref<2x64xf32, #tpu.memory_space<vmem>>, %arg9: memref<2x1xf32, #tpu.memory_space<vmem>>, %arg10: memref<2x256xf32, #tpu.memory_space<vmem>>) attributes {dimension_semantics = [#tpu.dimension_semantics<parallel>], iteration_bounds = array<i64: 1>, scalar_prefetch = 0 : i64, scratch_operands = 0 : i64, tpu.core_type = #tpu.core_type<tc>, window_params = [{transform_indices = @transform_0, window_bounds = array<i64: 5, 256>}, {pipeline_mode = #tpu.pipeline_mode<synchronous>, transform_indices = @transform_1, window_bounds = array<i64: 64, 5>}, {pipeline_mode = #tpu.pipeline_mode<synchronous>, transform_indices = @transform_2, window_bounds = array<i64: 64, 1>}, {pipeline_mode = #tpu.pipeline_mode<synchronous>, transform_indices = @transform_3, window_bounds = array<i64: 64, 64>}, {pipeline_mode = #tpu.pipeline_mode<synchronous>, transform_indices = @transform_4, window_bounds = array<i64: 64, 1>}, {pipeline_mode = #tpu.pipeline_mode<synchronous>, transform_indices = @transform_5, window_bounds = array<i64: 64, 64>}, {pipeline_mode = #tpu.pipeline_mode<synchronous>, transform_indices = @transform_6, window_bounds = array<i64: 64, 1>}, {pipeline_mode = #tpu.pipeline_mode<synchronous>, transform_indices = @transform_7, window_bounds = array<i64: 2, 64>}, {pipeline_mode = #tpu.pipeline_mode<synchronous>, transform_indices = @transform_8, window_bounds = array<i64: 2, 1>}, {transform_indices = @transform_9, window_bounds = array<i64: 2, 256>}]} {
    %c0 = arith.constant 0 : index
    %c0_0 = arith.constant 0 : index
    %0 = vector.load %arg1[%c0, %c0_0] : memref<5x256xf32, #tpu.memory_space<vmem>>, vector<5x256xf32>
    %c0_1 = arith.constant 0 : index
    %c0_2 = arith.constant 0 : index
    %1 = vector.load %arg2[%c0_1, %c0_2] : memref<64x5xf32, #tpu.memory_space<vmem>>, vector<64x5xf32>
    %cst = arith.constant dense<0.000000e+00> : vector<64x256xf32>
    %2 = tpu.matmul %1, %0, %cst {dimension_numbers = #tpu.dot_dimension_numbers<[1], [0], [0], [1], [0, 0, 1, 1], [], []>} : vector<64x5xf32>, vector<5x256xf32>, vector<64x256xf32> -> vector<64x256xf32>
    %c0_3 = arith.constant 0 : index
    %c0_4 = arith.constant 0 : index
    %3 = vector.load %arg3[%c0_3, %c0_4] : memref<64x1xf32, #tpu.memory_space<vmem>>, vector<64x1xf32>
    %4 = vector.broadcast %3 : vector<64x1xf32> to vector<64x256xf32>
    %5 = arith.addf %2, %4 : vector<64x256xf32>
    %cst_5 = arith.constant 0.000000e+00 : f32
    %6 = vector.broadcast %cst_5 : f32 to vector<64x256xf32>
    %7 = arith.maximumf %5, %6 : vector<64x256xf32>
    %c0_6 = arith.constant 0 : index
    %c0_7 = arith.constant 0 : index
    %8 = vector.load %arg4[%c0_6, %c0_7] : memref<64x64xbf16, #tpu.memory_space<vmem>>, vector<64x64xbf16>
    %9 = arith.truncf %7 : vector<64x256xf32> to vector<64x256xbf16>
    %cst_8 = arith.constant dense<0.000000e+00> : vector<64x256xf32>
    %10 = tpu.matmul %8, %9, %cst_8 {dimension_numbers = #tpu.dot_dimension_numbers<[1], [0], [0], [1], [0, 0, 1, 1], [], []>} : vector<64x64xbf16>, vector<64x256xbf16>, vector<64x256xf32> -> vector<64x256xf32>
    %c0_9 = arith.constant 0 : index
    %c0_10 = arith.constant 0 : index
    %11 = vector.load %arg5[%c0_9, %c0_10] : memref<64x1xf32, #tpu.memory_space<vmem>>, vector<64x1xf32>
    %12 = vector.broadcast %11 : vector<64x1xf32> to vector<64x256xf32>
    %13 = arith.addf %10, %12 : vector<64x256xf32>
    %cst_11 = arith.constant 0.000000e+00 : f32
    %14 = vector.broadcast %cst_11 : f32 to vector<64x256xf32>
    %15 = arith.maximumf %13, %14 : vector<64x256xf32>
    %c0_12 = arith.constant 0 : index
    %c0_13 = arith.constant 0 : index
    %16 = vector.load %arg6[%c0_12, %c0_13] : memref<64x64xbf16, #tpu.memory_space<vmem>>, vector<64x64xbf16>
    %17 = arith.truncf %15 : vector<64x256xf32> to vector<64x256xbf16>
    %cst_14 = arith.constant dense<0.000000e+00> : vector<64x256xf32>
    %18 = tpu.matmul %16, %17, %cst_14 {dimension_numbers = #tpu.dot_dimension_numbers<[1], [0], [0], [1], [0, 0, 1, 1], [], []>} : vector<64x64xbf16>, vector<64x256xbf16>, vector<64x256xf32> -> vector<64x256xf32>
    %c0_15 = arith.constant 0 : index
    %c0_16 = arith.constant 0 : index
    %19 = vector.load %arg7[%c0_15, %c0_16] : memref<64x1xf32, #tpu.memory_space<vmem>>, vector<64x1xf32>
    %20 = vector.broadcast %19 : vector<64x1xf32> to vector<64x256xf32>
    %21 = arith.addf %18, %20 : vector<64x256xf32>
    %cst_17 = arith.constant 0.000000e+00 : f32
    %22 = vector.broadcast %cst_17 : f32 to vector<64x256xf32>
    %23 = arith.maximumf %21, %22 : vector<64x256xf32>
    %c0_18 = arith.constant 0 : index
    %c0_19 = arith.constant 0 : index
    %24 = vector.load %arg8[%c0_18, %c0_19] : memref<2x64xf32, #tpu.memory_space<vmem>>, vector<2x64xf32>
    %cst_20 = arith.constant dense<0.000000e+00> : vector<2x256xf32>
    %25 = tpu.matmul %24, %23, %cst_20 {dimension_numbers = #tpu.dot_dimension_numbers<[1], [0], [0], [1], [0, 0, 1, 1], [], []>} : vector<2x64xf32>, vector<64x256xf32>, vector<2x256xf32> -> vector<2x256xf32>
    %c0_21 = arith.constant 0 : index
    %c0_22 = arith.constant 0 : index
    %26 = vector.load %arg9[%c0_21, %c0_22] : memref<2x1xf32, #tpu.memory_space<vmem>>, vector<2x1xf32>
    %27 = vector.broadcast %26 : vector<2x1xf32> to vector<2x256xf32>
    %28 = arith.addf %25, %27 : vector<2x256xf32>
    %c0_23 = arith.constant 0 : index
    %c0_24 = arith.constant 0 : index
    %29 = vector.load %arg10[%c0_23, %c0_24] : memref<2x256xf32, #tpu.memory_space<vmem>>, vector<2x256xf32>
    tpu.vector_store %arg10[%c0_23, %c0_24], %28 {strides = array<i32>} : memref<2x256xf32, #tpu.memory_space<vmem>>, vector<2x256xf32>,
    return
  }
  func.func @transform_0(%arg0: i32) -> (i32, i32) {
    %c0_i32 = arith.constant 0 : i32
    %c0_i32_0 = arith.constant 0 : i32
    return %c0_i32, %arg0 : i32, i32
  }
  func.func @transform_1(%arg0: i32) -> (i32, i32) {
    %c0_i32 = arith.constant 0 : i32
    %c0_i32_0 = arith.constant 0 : i32
    %c0_i32_1 = arith.constant 0 : i32
    return %c0_i32, %c0_i32_0 : i32, i32
  }
  func.func @transform_2(%arg0: i32) -> (i32, i32) {
    %c0_i32 = arith.constant 0 : i32
    %c0_i32_0 = arith.constant 0 : i32
    %c0_i32_1 = arith.constant 0 : i32
    return %c0_i32, %c0_i32_0 : i32, i32
  }
  func.func @transform_3(%arg0: i32) -> (i32, i32) {
    %c0_i32 = arith.constant 0 : i32
    %c0_i32_0 = arith.constant 0 : i32
    %c0_i32_1 = arith.constant 0 : i32
    return %c0_i32, %c0_i32_0 : i32, i32
  }
  func.func @transform_4(%arg0: i32) -> (i32, i32) {
    %c0_i32 = arith.constant 0 : i32
    %c0_i32_0 = arith.constant 0 : i32
    %c0_i32_1 = arith.constant 0 : i32
    return %c0_i32, %c0_i32_0 : i32, i32
  }
  func.func @transform_5(%arg0: i32) -> (i32, i32) {
    %c0_i32 = arith.constant 0 : i32
    %c0_i32_0 = arith.constant 0 : i32
    %c0_i32_1 = arith.constant 0 : i32
    return %c0_i32, %c0_i32_0 : i32, i32
  }
  func.func @transform_6(%arg0: i32) -> (i32, i32) {
    %c0_i32 = arith.constant 0 : i32
    %c0_i32_0 = arith.constant 0 : i32
    %c0_i32_1 = arith.constant 0 : i32
    return %c0_i32, %c0_i32_0 : i32, i32
  }
  func.func @transform_7(%arg0: i32) -> (i32, i32) {
    %c0_i32 = arith.constant 0 : i32
    %c0_i32_0 = arith.constant 0 : i32
    %c0_i32_1 = arith.constant 0 : i32
    return %c0_i32, %c0_i32_0 : i32, i32
  }
  func.func @transform_8(%arg0: i32) -> (i32, i32) {
    %c0_i32 = arith.constant 0 : i32
    %c0_i32_0 = arith.constant 0 : i32
    %c0_i32_1 = arith.constant 0 : i32
    return %c0_i32, %c0_i32_0 : i32, i32
  }
  func.func @transform_9(%arg0: i32) -> (i32, i32) {
    %c0_i32 = arith.constant 0 : i32
    %c0_i32_0 = arith.constant 0 : i32
    return %c0_i32, %arg0 : i32, i32
  }
}

</mosaic_0001>

<llo_original>
// kernel: tpu_custom_call.1
$region0: #{tpu_custom_call.1}
  #allocation0 [shape = 'u32[]', space=smem, size = 0x4, offset = 0x4, fixed_abs, tag = 'smem constant byte address 0x4 - core index']
  #allocation1 [shape = 'u32[72,128]{1,0:T(1,128)}', space=vmem, size = 0x9000, scoped, tag = 'internal scratch']
  %s0 = inlined_call_operand.vmem [shape: f32[5,256], index: 0, kind: input, shape index: {}]
  %s1 = inlined_call_operand.vmem [shape: f32[64,5], index: 1, kind: input, shape index: {}]
  %s2 = inlined_call_operand.vmem [shape: f32[64,1], index: 2, kind: input, shape index: {}]
  %s3 = inlined_call_operand.vmem [shape: bf16[64,64], index: 3, kind: input, shape index: {}]
  %s4 = inlined_call_operand.vmem [shape: f32[64,1], index: 4, kind: input, shape index: {}]
  %s5 = inlined_call_operand.vmem [shape: bf16[64,64], index: 5, kind: input, shape index: {}]
  %s6 = inlined_call_operand.vmem [shape: f32[64,1], index: 6, kind: input, shape index: {}]
  %s7 = inlined_call_operand.vmem [shape: f32[2,64], index: 7, kind: input, shape index: {}]
  %s8 = inlined_call_operand.vmem [shape: f32[2,1], index: 8, kind: input, shape index: {}]
  %s9 = inlined_call_operand.hbm [shape: f32[2,256], index: 9, kind: output, shape index: {}]
  %s10 = sld [smem:[#allocation0]]
  $region46: #{tpu_custom_call.1} parent=0
    _
  %s12 = ssub.s32 1, %s10
  %s13 = scalar_select 0, %s12, %s10
  $region1: #{tpu_custom_call.1} parent=0
    #allocation2 [shape = 'u8[2048]{0}', space=vmem, size = 0x800, scoped, tag = 'output window, operand 0, single buffered']
    #allocation3 [shape = 's32[1]{0}', space=sflag, size = 0x4, scoped, tag = 'scoped memory for tpu_custom_call.1']
    %14 = vsyncpa [#allocation3], 0
    // Predicated region
    $region2: #{tpu_custom_call.1} parent=1 // pred_check
      _
    $region3: #{tpu_custom_call.1} parent=1 // pred_check_branch
      %16 = sbr.rel (0) target = $region5
    $region4: #{tpu_custom_call.1} parent=1 // pred_region
      _
    $region5: #{tpu_custom_call.1} parent=1 // pred_fallthru
      _
    // Predicated region
    $region6: #{tpu_custom_call.1} parent=1 // pred_check
      _
    $region7: #{tpu_custom_call.1} parent=1 // pred_check_branch
      %18 = sbr.rel (0) target = $region9
    $region8: #{tpu_custom_call.1} parent=1 // pred_region
      _
    $region9: #{tpu_custom_call.1} parent=1 // pred_fallthru
      _
    // Predicated region
    $region10: #{tpu_custom_call.1} parent=1 // pred_check
      _
    $region11: #{tpu_custom_call.1} parent=1 // pred_check_branch
      %20 = sbr.rel (0) target = $region13
    $region12: #{tpu_custom_call.1} parent=1 // pred_region
      _
    $region13: #{tpu_custom_call.1} parent=1 // pred_fallthru
      _
    // Predicated region
    $region14: #{tpu_custom_call.1} parent=1 // pred_check
      _
    $region15: #{tpu_custom_call.1} parent=1 // pred_check_branch
      %22 = sbr.rel (0) target = $region17
    $region16: #{tpu_custom_call.1} parent=1 // pred_region
      _
    $region17: #{tpu_custom_call.1} parent=1 // pred_fallthru
      _
    // Predicated region
    $region18: #{tpu_custom_call.1} parent=1 // pred_check
      _
    $region19: #{tpu_custom_call.1} parent=1 // pred_check_branch
      %24 = sbr.rel (0) target = $region21
    $region20: #{tpu_custom_call.1} parent=1 // pred_region
      _
    $region21: #{tpu_custom_call.1} parent=1 // pred_fallthru
      _
    // Predicated region
    $region22: #{tpu_custom_call.1} parent=1 // pred_check
      _
    $region23: #{tpu_custom_call.1} parent=1 // pred_check_branch
      %26 = sbr.rel (0) target = $region25
    $region24: #{tpu_custom_call.1} parent=1 // pred_region
      _
    $region25: #{tpu_custom_call.1} parent=1 // pred_fallthru
      _
    // Predicated region
    $region26: #{tpu_custom_call.1} parent=1 // pred_check
      _
    $region27: #{tpu_custom_call.1} parent=1 // pred_check_branch
      %28 = sbr.rel (0) target = $region29
    $region28: #{tpu_custom_call.1} parent=1 // pred_region
      _
    $region29: #{tpu_custom_call.1} parent=1 // pred_fallthru
      _
    // Predicated region
    $region30: #{tpu_custom_call.1} parent=1 // pred_check
      _
    $region31: #{tpu_custom_call.1} parent=1 // pred_check_branch
      %30 = sbr.rel (0) target = $region33
    $region32: #{tpu_custom_call.1} parent=1 // pred_region
      _
    $region33: #{tpu_custom_call.1} parent=1 // pred_fallthru
      _
    // Predicated region
    $region34: #{tpu_custom_call.1} parent=1 // pred_check
      _
    $region35: #{tpu_custom_call.1} parent=1 // pred_check_branch
      %32 = sbr.rel (0) target = $region37
    $region36: #{tpu_custom_call.1} parent=1 // pred_region
      _
    $region37: #{tpu_custom_call.1} parent=1 // pred_fallthru
      _
    %v34 = vld [vmem:[%s0] sm:$0x1f]
    %v35 = vld [vmem:[%s0 + $0x8] sm:$0x1f]
    %v36 = vld [vmem:[%s1] sm:$0xff]
    %v37 = vld [vmem:[%s1 + $0x8] sm:$0xff]
    %v38 = vld [vmem:[%s1 + $0x10] sm:$0xff]
    %v39 = vld [vmem:[%s1 + $0x18] sm:$0xff]
    %v40 = vld [vmem:[%s1 + $0x20] sm:$0xff]
    %v41 = vld [vmem:[%s1 + $0x28] sm:$0xff]
    %v42 = vld [vmem:[%s1 + $0x30] sm:$0xff]
    %v43 = vld [vmem:[%s1 + $0x38] sm:$0xff]
    %v44 = vld [vmem:[%s2] sm:$0xff]
    %v45 = vld [vmem:[%s2 + $0x8] sm:$0xff]
    %v46 = vld [vmem:[%s2 + $0x10] sm:$0xff]
    %v47 = vld [vmem:[%s2 + $0x18] sm:$0xff]
    %v48 = vld [vmem:[%s2 + $0x20] sm:$0xff]
    %v49 = vld [vmem:[%s2 + $0x28] sm:$0xff]
    %v50 = vld [vmem:[%s2 + $0x30] sm:$0xff]
    %v51 = vld [vmem:[%s2 + $0x38] sm:$0xff]
    %53 = vset.pattern.permute.xlu0 0
    %54 = vperm.xlu0 %53, %v44
    %v55 = vpop.permute.xlu0 %54
    %58 = vset.pattern.permute.xlu0 0
    %59 = vperm.xlu0 %58, %v45
    %v60 = vpop.permute.xlu0 %59
    %63 = vset.pattern.permute.xlu0 0
    %64 = vperm.xlu0 %63, %v46
    %v65 = vpop.permute.xlu0 %64
    %68 = vset.pattern.permute.xlu0 0
    %69 = vperm.xlu0 %68, %v47
    %v70 = vpop.permute.xlu0 %69
    %73 = vset.pattern.permute.xlu0 0
    %74 = vperm.xlu0 %73, %v48
    %v75 = vpop.permute.xlu0 %74
    %78 = vset.pattern.permute.xlu0 0
    %79 = vperm.xlu0 %78, %v49
    %v80 = vpop.permute.xlu0 %79
    %83 = vset.pattern.permute.xlu0 0
    %84 = vperm.xlu0 %83, %v50
    %v85 = vpop.permute.xlu0 %84
    %88 = vset.pattern.permute.xlu0 0
    %89 = vperm.xlu0 %88, %v51
    %v90 = vpop.permute.xlu0 %89
    %vm92 = vcmask 39936
    %v94 = vsel %vm92, %v36, 0
    %v97 = vsel %vm92, %v37, 0
    %v100 = vsel %vm92, %v38, 0
    %v103 = vsel %vm92, %v39, 0
    %v106 = vsel %vm92, %v40, 0
    %v109 = vsel %vm92, %v41, 0
    %v112 = vsel %vm92, %v42, 0
    %v115 = vsel %vm92, %v43, 0
    %vm117 = vcmask 1044480
    %v119 = vsel %vm117, %v34, 0
    %v122 = vsel %vm117, %v35, 0
    %124 = vmatpush.msra.mxu0 0.0
    %125 = vmatpush.msra.mxu0 0.0
    %126 = vmatpush.msra.mxu0 0.0
    %127 = vmatpush.msra.mxu0 0.0
    %128 = vmatpush.msra.mxu0 0.0
    %129 = vmatpush.msra.mxu0 0.0
    %130 = vmatpush.msra.mxu0 0.0
    %131 = vmatpush.msra.mxu0 0.0
    %132 = vmatpush.msra.mxu0 0.0
    %133 = vmatpush.msra.mxu0 0.0
    %134 = vmatpush.msra.mxu0 0.0
    %135 = vmatpush.msra.mxu0 0.0
    %136 = vmatpush.msra.mxu0 0.0
    %137 = vmatpush.msra.mxu0 0.0
    %138 = vmatpush.msra.mxu0 0.0
    %139 = vmatpush.msra.mxu0 %v119
    %140 = vmatmul.f32.gmra.mxu0 %v94
    %v141 = vpop.f32.mrf.mxu0
    %v142 = vadd.f32 %v55, %v141
    %143 = vmatmul.f32.gmra.mxu0 %v97
    %v144 = vpop.f32.mrf.mxu0
    %v145 = vadd.f32 %v60, %v144
    %146 = vmatmul.f32.gmra.mxu0 %v100
    %v147 = vpop.f32.mrf.mxu0
    %v148 = vadd.f32 %v65, %v147
    %149 = vmatmul.f32.gmra.mxu0 %v103
    %v150 = vpop.f32.mrf.mxu0
    %v151 = vadd.f32 %v70, %v150
    %152 = vmatmul.f32.gmra.mxu0 %v106
    %v153 = vpop.f32.mrf.mxu0
    %v154 = vadd.f32 %v75, %v153
    %155 = vmatmul.f32.gmra.mxu0 %v109
    %v156 = vpop.f32.mrf.mxu0
    %v157 = vadd.f32 %v80, %v156
    %158 = vmatmul.f32.gmra.mxu0 %v112
    %v159 = vpop.f32.mrf.mxu0
    %v160 = vadd.f32 %v85, %v159
    %161 = vmatmul.f32.gmra.mxu0 %v115
    %v162 = vpop.f32.mrf.mxu0
    %v163 = vadd.f32 %v90, %v162
    %164 = vdwg.mxu0
    %165 = vmatpush.msra.mxu0 0.0
    %166 = vmatpush.msra.mxu0 0.0
    %167 = vmatpush.msra.mxu0 0.0
    %168 = vmatpush.msra.mxu0 0.0
    %169 = vmatpush.msra.mxu0 0.0
    %170 = vmatpush.msra.mxu0 0.0
    %171 = vmatpush.msra.mxu0 0.0
    %172 = vmatpush.msra.mxu0 0.0
    %173 = vmatpush.msra.mxu0 0.0
    %174 = vmatpush.msra.mxu0 0.0
    %175 = vmatpush.msra.mxu0 0.0
    %176 = vmatpush.msra.mxu0 0.0
    %177 = vmatpush.msra.mxu0 0.0
    %178 = vmatpush.msra.mxu0 0.0
    %179 = vmatpush.msra.mxu0 0.0
    %180 = vmatpush.msra.mxu0 %v122
    %181 = vmatmul.f32.gmra.mxu0 %v94
    %v182 = vpop.f32.mrf.mxu0
    %v183 = vadd.f32 %v55, %v182
    %184 = vmatmul.f32.gmra.mxu0 %v97
    %v185 = vpop.f32.mrf.mxu0
    %v186 = vadd.f32 %v60, %v185
    %187 = vmatmul.f32.gmra.mxu0 %v100
    %v188 = vpop.f32.mrf.mxu0
    %v189 = vadd.f32 %v65, %v188
    %190 = vmatmul.f32.gmra.mxu0 %v103
    %v191 = vpop.f32.mrf.mxu0
    %v192 = vadd.f32 %v70, %v191
    %193 = vmatmul.f32.gmra.mxu0 %v106
    %v194 = vpop.f32.mrf.mxu0
    %v195 = vadd.f32 %v75, %v194
    %196 = vmatmul.f32.gmra.mxu0 %v109
    %v197 = vpop.f32.mrf.mxu0
    %v198 = vadd.f32 %v80, %v197
    %199 = vmatmul.f32.gmra.mxu0 %v112
    %v200 = vpop.f32.mrf.mxu0
    %v201 = vadd.f32 %v85, %v200
    %202 = vmatmul.f32.gmra.mxu0 %v115
    %v203 = vpop.f32.mrf.mxu0
    %v204 = vadd.f32 %v90, %v203
    %205 = vdwg.mxu0
    %v206 = vmax.f32 %v142, 0.0
    %v207 = vmax.f32 %v183, 0.0
    %v208 = vmax.f32 %v145, 0.0
    %v209 = vmax.f32 %v186, 0.0
    %v210 = vmax.f32 %v148, 0.0
    %v211 = vmax.f32 %v189, 0.0
    %v212 = vmax.f32 %v151, 0.0
    %v213 = vmax.f32 %v192, 0.0
    %v214 = vmax.f32 %v154, 0.0
    %v215 = vmax.f32 %v195, 0.0
    %v216 = vmax.f32 %v157, 0.0
    %v217 = vmax.f32 %v198, 0.0
    %v218 = vmax.f32 %v160, 0.0
    %v219 = vmax.f32 %v201, 0.0
    %v220 = vmax.f32 %v163, 0.0
    %v221 = vmax.f32 %v204, 0.0
    %v222 = vld [vmem:[%s3] sm:$0xf]
    %v223 = vld [vmem:[%s3 + $0x4] sm:$0xf]
    %v224 = vld [vmem:[%s3 + $0x8] sm:$0xf]
    %v225 = vld [vmem:[%s3 + $0xc] sm:$0xf]
    %v226 = vld [vmem:[%s3 + $0x10] sm:$0xf]
    %v227 = vld [vmem:[%s3 + $0x14] sm:$0xf]
    %v228 = vld [vmem:[%s3 + $0x18] sm:$0xf]
    %v229 = vld [vmem:[%s3 + $0x1c] sm:$0xf]
    %v230 = vpack.c.bf16 %v208, %v206
    %v231 = vpack.c.bf16 %v209, %v207
    %v232 = vpack.c.bf16 %v212, %v210
    %v233 = vpack.c.bf16 %v213, %v211
    %v234 = vpack.c.bf16 %v216, %v214
    %v235 = vpack.c.bf16 %v217, %v215
    %v236 = vpack.c.bf16 %v220, %v218
    %v237 = vpack.c.bf16 %v221, %v219
    %v238 = vld [vmem:[%s4] sm:$0xff]
    %v239 = vld [vmem:[%s4 + $0x8] sm:$0xff]
    %v240 = vld [vmem:[%s4 + $0x10] sm:$0xff]
    %v241 = vld [vmem:[%s4 + $0x18] sm:$0xff]
    %v242 = vld [vmem:[%s4 + $0x20] sm:$0xff]
    %v243 = vld [vmem:[%s4 + $0x28] sm:$0xff]
    %v244 = vld [vmem:[%s4 + $0x30] sm:$0xff]
    %v245 = vld [vmem:[%s4 + $0x38] sm:$0xff]
    %247 = vset.pattern.permute.xlu0 0
    %248 = vperm.xlu0 %247, %v238
    %v249 = vpop.permute.xlu0 %248
    %252 = vset.pattern.permute.xlu0 0
    %253 = vperm.xlu0 %252, %v239
    %v254 = vpop.permute.xlu0 %253
    %257 = vset.pattern.permute.xlu0 0
    %258 = vperm.xlu0 %257, %v240
    %v259 = vpop.permute.xlu0 %258
    %262 = vset.pattern.permute.xlu0 0
    %263 = vperm.xlu0 %262, %v241
    %v264 = vpop.permute.xlu0 %263
    %267 = vset.pattern.permute.xlu0 0
    %268 = vperm.xlu0 %267, %v242
    %v269 = vpop.permute.xlu0 %268
    %272 = vset.pattern.permute.xlu0 0
    %273 = vperm.xlu0 %272, %v243
    %v274 = vpop.permute.xlu0 %273
    %277 = vset.pattern.permute.xlu0 0
    %278 = vperm.xlu0 %277, %v244
    %v279 = vpop.permute.xlu0 %278
    %282 = vset.pattern.permute.xlu0 0
    %283 = vperm.xlu0 %282, %v245
    %v284 = vpop.permute.xlu0 %283
    %v294 = vunpack.c.l.b16 %v222
    %v295 = vunpack.c.l.b16 %v223
    %v296 = vunpack.c.l.b16 %v224
    %v297 = vunpack.c.l.b16 %v225
    %v298 = vunpack.c.l.b16 %v226
    %v299 = vunpack.c.l.b16 %v227
    %v300 = vunpack.c.l.b16 %v228
    %v301 = vunpack.c.l.b16 %v229
    %v302 = vpack.c.b16 %v295, %v294
    %v303 = vpack.c.b16 %v297, %v296
    %v304 = vpack.c.b16 %v299, %v298
    %v305 = vpack.c.b16 %v301, %v300
    %vm306 = vcmask 523264
    %v308 = vsel %vm306, %v302, 0
    %v311 = vsel %vm306, %v303, 0
    %v314 = vsel %vm306, %v304, 0
    %v317 = vsel %vm306, %v305, 0
    %319 = vmatpush.bf16.msra.mxu0 0
    %320 = vmatpush.bf16.msra.mxu0 0
    %321 = vmatpush.bf16.msra.mxu0 0
    %322 = vmatpush.bf16.msra.mxu0 0
    %323 = vmatpush.bf16.msra.mxu0 %v236
    %324 = vmatpush.bf16.msra.mxu0 %v234
    %325 = vmatpush.bf16.msra.mxu0 %v232
    %326 = vmatpush.bf16.msra.mxu0 %v230
    %327 = vmatmul.bf16.gmra.mxu0 %v308
    %v328 = vpop.f32.mrf.mxu0
    %v329 = vadd.f32 %v249, %v328
    %v330 = vpop.f32.mrf.mxu0
    %v331 = vadd.f32 %v254, %v330
    %332 = vmatmul.bf16.gmra.mxu0 %v311
    %v333 = vpop.f32.mrf.mxu0
    %v334 = vadd.f32 %v259, %v333
    %v335 = vpop.f32.mrf.mxu0
    %v336 = vadd.f32 %v264, %v335
    %337 = vmatmul.bf16.gmra.mxu0 %v314
    %v338 = vpop.f32.mrf.mxu0
    %v339 = vadd.f32 %v269, %v338
    %v340 = vpop.f32.mrf.mxu0
    %v341 = vadd.f32 %v274, %v340
    %342 = vmatmul.bf16.gmra.mxu0 %v317
    %v343 = vpop.f32.mrf.mxu0
    %v344 = vadd.f32 %v279, %v343
    %v345 = vpop.f32.mrf.mxu0
    %v346 = vadd.f32 %v284, %v345
    %347 = vdwg.mxu0
    %348 = vmatpush.bf16.msra.mxu0 0
    %349 = vmatpush.bf16.msra.mxu0 0
    %350 = vmatpush.bf16.msra.mxu0 0
    %351 = vmatpush.bf16.msra.mxu0 0
    %352 = vmatpush.bf16.msra.mxu0 %v237
    %353 = vmatpush.bf16.msra.mxu0 %v235
    %354 = vmatpush.bf16.msra.mxu0 %v233
    %355 = vmatpush.bf16.msra.mxu0 %v231
    %356 = vmatmul.bf16.gmra.mxu0 %v308
    %v357 = vpop.f32.mrf.mxu0
    %v358 = vadd.f32 %v249, %v357
    %v359 = vpop.f32.mrf.mxu0
    %v360 = vadd.f32 %v254, %v359
    %361 = vmatmul.bf16.gmra.mxu0 %v311
    %v362 = vpop.f32.mrf.mxu0
    %v363 = vadd.f32 %v259, %v362
    %v364 = vpop.f32.mrf.mxu0
    %v365 = vadd.f32 %v264, %v364
    %366 = vmatmul.bf16.gmra.mxu0 %v314
    %v367 = vpop.f32.mrf.mxu0
    %v368 = vadd.f32 %v269, %v367
    %v369 = vpop.f32.mrf.mxu0
    %v370 = vadd.f32 %v274, %v369
    %371 = vmatmul.bf16.gmra.mxu0 %v317
    %v372 = vpop.f32.mrf.mxu0
    %v373 = vadd.f32 %v279, %v372
    %v374 = vpop.f32.mrf.mxu0
    %v375 = vadd.f32 %v284, %v374
    %376 = vdwg.mxu0
    %v377 = vmax.f32 %v329, 0.0
    %v378 = vmax.f32 %v358, 0.0
    %v379 = vmax.f32 %v331, 0.0
    %v380 = vmax.f32 %v360, 0.0
    %v381 = vmax.f32 %v334, 0.0
    %v382 = vmax.f32 %v363, 0.0
    %v383 = vmax.f32 %v336, 0.0
    %v384 = vmax.f32 %v365, 0.0
    %v385 = vmax.f32 %v339, 0.0
    %v386 = vmax.f32 %v368, 0.0
    %v387 = vmax.f32 %v341, 0.0
    %v388 = vmax.f32 %v370, 0.0
    %v389 = vmax.f32 %v344, 0.0
    %v390 = vmax.f32 %v373, 0.0
    %v391 = vmax.f32 %v346, 0.0
    %v392 = vmax.f32 %v375, 0.0
    %v393 = vld [vmem:[%s5] sm:$0xf]
    %v394 = vld [vmem:[%s5 + $0x4] sm:$0xf]
    %v395 = vld [vmem:[%s5 + $0x8] sm:$0xf]
    %v396 = vld [vmem:[%s5 + $0xc] sm:$0xf]
    %v397 = vld [vmem:[%s5 + $0x10] sm:$0xf]
    %v398 = vld [vmem:[%s5 + $0x14] sm:$0xf]
    %v399 = vld [vmem:[%s5 + $0x18] sm:$0xf]
    %v400 = vld [vmem:[%s5 + $0x1c] sm:$0xf]
    %v401 = vpack.c.bf16 %v379, %v377
    %v402 = vpack.c.bf16 %v380, %v378
    %v403 = vpack.c.bf16 %v383, %v381
    %v404 = vpack.c.bf16 %v384, %v382
    %v405 = vpack.c.bf16 %v387, %v385
    %v406 = vpack.c.bf16 %v388, %v386
    %v407 = vpack.c.bf16 %v391, %v389
    %v408 = vpack.c.bf16 %v392, %v390
    %v409 = vld [vmem:[%s6] sm:$0xff]
    %v410 = vld [vmem:[%s6 + $0x8] sm:$0xff]
    %v411 = vld [vmem:[%s6 + $0x10] sm:$0xff]
    %v412 = vld [vmem:[%s6 + $0x18] sm:$0xff]
    %v413 = vld [vmem:[%s6 + $0x20] sm:$0xff]
    %v414 = vld [vmem:[%s6 + $0x28] sm:$0xff]
    %v415 = vld [vmem:[%s6 + $0x30] sm:$0xff]
    %v416 = vld [vmem:[%s6 + $0x38] sm:$0xff]
    %418 = vset.pattern.permute.xlu0 0
    %419 = vperm.xlu0 %418, %v409
    %v420 = vpop.permute.xlu0 %419
    %423 = vset.pattern.permute.xlu0 0
    %424 = vperm.xlu0 %423, %v410
    %v425 = vpop.permute.xlu0 %424
    %428 = vset.pattern.permute.xlu0 0
    %429 = vperm.xlu0 %428, %v411
    %v430 = vpop.permute.xlu0 %429
    %433 = vset.pattern.permute.xlu0 0
    %434 = vperm.xlu0 %433, %v412
    %v435 = vpop.permute.xlu0 %434
    %438 = vset.pattern.permute.xlu0 0
    %439 = vperm.xlu0 %438, %v413
    %v440 = vpop.permute.xlu0 %439
    %443 = vset.pattern.permute.xlu0 0
    %444 = vperm.xlu0 %443, %v414
    %v445 = vpop.permute.xlu0 %444
    %448 = vset.pattern.permute.xlu0 0
    %449 = vperm.xlu0 %448, %v415
    %v450 = vpop.permute.xlu0 %449
    %453 = vset.pattern.permute.xlu0 0
    %454 = vperm.xlu0 %453, %v416
    %v455 = vpop.permute.xlu0 %454
    %v465 = vunpack.c.l.b16 %v393
    %v466 = vunpack.c.l.b16 %v394
    %v467 = vunpack.c.l.b16 %v395
    %v468 = vunpack.c.l.b16 %v396
    %v469 = vunpack.c.l.b16 %v397
    %v470 = vunpack.c.l.b16 %v398
    %v471 = vunpack.c.l.b16 %v399
    %v472 = vunpack.c.l.b16 %v400
    %v473 = vpack.c.b16 %v466, %v465
    %v474 = vpack.c.b16 %v468, %v467
    %v475 = vpack.c.b16 %v470, %v469
    %v476 = vpack.c.b16 %v472, %v471
    %v478 = vsel %vm306, %v473, 0
    %v481 = vsel %vm306, %v474, 0
    %v484 = vsel %vm306, %v475, 0
    %v487 = vsel %vm306, %v476, 0
    %489 = vmatpush.bf16.msra.mxu0 0
    %490 = vmatpush.bf16.msra.mxu0 0
    %491 = vmatpush.bf16.msra.mxu0 0
    %492 = vmatpush.bf16.msra.mxu0 0
    %493 = vmatpush.bf16.msra.mxu0 %v407
    %494 = vmatpush.bf16.msra.mxu0 %v405
    %495 = vmatpush.bf16.msra.mxu0 %v403
    %496 = vmatpush.bf16.msra.mxu0 %v401
    %497 = vmatmul.bf16.gmra.mxu0 %v478
    %v498 = vpop.f32.mrf.mxu0
    %v499 = vadd.f32 %v420, %v498
    %v500 = vpop.f32.mrf.mxu0
    %v501 = vadd.f32 %v425, %v500
    %502 = vmatmul.bf16.gmra.mxu0 %v481
    %v503 = vpop.f32.mrf.mxu0
    %v504 = vadd.f32 %v430, %v503
    %v505 = vpop.f32.mrf.mxu0
    %v506 = vadd.f32 %v435, %v505
    %507 = vmatmul.bf16.gmra.mxu0 %v484
    %v508 = vpop.f32.mrf.mxu0
    %v509 = vadd.f32 %v440, %v508
    %v510 = vpop.f32.mrf.mxu0
    %v511 = vadd.f32 %v445, %v510
    %512 = vmatmul.bf16.gmra.mxu0 %v487
    %v513 = vpop.f32.mrf.mxu0
    %v514 = vadd.f32 %v450, %v513
    %v515 = vpop.f32.mrf.mxu0
    %v516 = vadd.f32 %v455, %v515
    %517 = vdwg.mxu0
    %518 = vmatpush.bf16.msra.mxu0 0
    %519 = vmatpush.bf16.msra.mxu0 0
    %520 = vmatpush.bf16.msra.mxu0 0
    %521 = vmatpush.bf16.msra.mxu0 0
    %522 = vmatpush.bf16.msra.mxu0 %v408
    %523 = vmatpush.bf16.msra.mxu0 %v406
    %524 = vmatpush.bf16.msra.mxu0 %v404
    %525 = vmatpush.bf16.msra.mxu0 %v402
    %526 = vmatmul.bf16.gmra.mxu0 %v478
    %v527 = vpop.f32.mrf.mxu0
    %v528 = vadd.f32 %v420, %v527
    %v529 = vpop.f32.mrf.mxu0
    %v530 = vadd.f32 %v425, %v529
    %531 = vmatmul.bf16.gmra.mxu0 %v481
    %v532 = vpop.f32.mrf.mxu0
    %v533 = vadd.f32 %v430, %v532
    %v534 = vpop.f32.mrf.mxu0
    %v535 = vadd.f32 %v435, %v534
    %536 = vmatmul.bf16.gmra.mxu0 %v484
    %v537 = vpop.f32.mrf.mxu0
    %v538 = vadd.f32 %v440, %v537
    %v539 = vpop.f32.mrf.mxu0
    %v540 = vadd.f32 %v445, %v539
    %541 = vmatmul.bf16.gmra.mxu0 %v487
    %v542 = vpop.f32.mrf.mxu0
    %v543 = vadd.f32 %v450, %v542
    %v544 = vpop.f32.mrf.mxu0
    %v545 = vadd.f32 %v455, %v544
    %546 = vdwg.mxu0
    %v547 = vmax.f32 %v499, 0.0
    %v548 = vmax.f32 %v528, 0.0
    %v549 = vmax.f32 %v501, 0.0
    %v550 = vmax.f32 %v530, 0.0
    %v551 = vmax.f32 %v504, 0.0
    %v552 = vmax.f32 %v533, 0.0
    %v553 = vmax.f32 %v506, 0.0
    %v554 = vmax.f32 %v535, 0.0
    %v555 = vmax.f32 %v509, 0.0
    %v556 = vmax.f32 %v538, 0.0
    %v557 = vmax.f32 %v511, 0.0
    %v558 = vmax.f32 %v540, 0.0
    %v559 = vmax.f32 %v514, 0.0
    %v560 = vmax.f32 %v543, 0.0
    %v561 = vmax.f32 %v516, 0.0
    %v562 = vmax.f32 %v545, 0.0
    %v563 = vld [vmem:[%s7] sm:$0x3]
    %v564 = vld [vmem:[%s8] sm:$0x3]
    %566 = vset.pattern.permute.xlu0 0
    %567 = vperm.xlu0 %566, %v564
    %v568 = vpop.permute.xlu0 %567
    %v571 = vsel %vm306, %v563, 0
    %573 = vmatpush.msra.mxu0 0.0
    %574 = vmatpush.msra.mxu0 0.0
    %575 = vmatpush.msra.mxu0 0.0
    %576 = vmatpush.msra.mxu0 0.0
    %577 = vmatpush.msra.mxu0 0.0
    %578 = vmatpush.msra.mxu0 0.0
    %579 = vmatpush.msra.mxu0 0.0
    %580 = vmatpush.msra.mxu0 0.0
    %581 = vmatpush.msra.mxu0 %v561
    %582 = vmatpush.msra.mxu0 %v559
    %583 = vmatpush.msra.mxu0 %v557
    %584 = vmatpush.msra.mxu0 %v555
    %585 = vmatpush.msra.mxu0 %v553
    %586 = vmatpush.msra.mxu0 %v551
    %587 = vmatpush.msra.mxu0 %v549
    %588 = vmatpush.msra.mxu0 %v547
    %589 = vmatmul.f32.gmra.mxu0 %v571
    %v590 = vpop.f32.mrf.mxu0
    %v591 = vadd.f32 %v568, %v590
    %592 = vdwg.mxu0
    %593 = vmatpush.msra.mxu0 0.0
    %594 = vmatpush.msra.mxu0 0.0
    %595 = vmatpush.msra.mxu0 0.0
    %596 = vmatpush.msra.mxu0 0.0
    %597 = vmatpush.msra.mxu0 0.0
    %598 = vmatpush.msra.mxu0 0.0
    %599 = vmatpush.msra.mxu0 0.0
    %600 = vmatpush.msra.mxu0 0.0
    %601 = vmatpush.msra.mxu0 %v562
    %602 = vmatpush.msra.mxu0 %v560
    %603 = vmatpush.msra.mxu0 %v558
    %604 = vmatpush.msra.mxu0 %v556
    %605 = vmatpush.msra.mxu0 %v554
    %606 = vmatpush.msra.mxu0 %v552
    %607 = vmatpush.msra.mxu0 %v550
    %608 = vmatpush.msra.mxu0 %v548
    %609 = vmatmul.f32.gmra.mxu0 %v571
    %v610 = vpop.f32.mrf.mxu0
    %v611 = vadd.f32 %v568, %v610
    %612 = vdwg.mxu0
    %v615 = vrot.slane %v611, 6
    %vm616 = vcmask 1041408
    %v617 = vsel %vm616, %v591, %v615
    %619 = vst [vmem:[#allocation2] sm:$0xf] %v617
    // Predicated region
    $region38: #{tpu_custom_call.1} parent=1 // pred_check
      _
    $region39: #{tpu_custom_call.1} parent=1 // pred_check_branch
      %621 = sbr.rel (0) target = $region41
    $region40: #{tpu_custom_call.1} parent=1 // pred_region
      %623 = vsyncadd [#allocation3], 0
      %s625 = sshll.u32 [#allocation2], 4
      %s626 = int_to_ptr.vmem [resolvable:$true] %s625
      %s627 = sshll.u32 %s9, 4
      %s628 = int_to_ptr.hbm [resolvable:$true] %s627
      %630 = dma.vmem_to_hbm [thread:$0]  %s626, 64, %s628, [#allocation3]
    $region41: #{tpu_custom_call.1} parent=1 // pred_fallthru
      _
    // Predicated region
    $region42: #{tpu_custom_call.1} parent=1 // pred_check
      _
    $region43: #{tpu_custom_call.1} parent=1 // pred_check_branch
      %632 = sbr.rel (0) target = $region45
    $region44: #{tpu_custom_call.1} parent=1 // pred_region
      %634 = dma.done [#allocation3], 64
    $region45: #{tpu_custom_call.1} parent=1 // pred_fallthru
      _
    %635 = vsyncpa [#allocation3], 1

</llo_original>
